<compile_context>
chip_gen: v5e
topology: v5e:2x2
jax: 0.10.0
libtpu: 0.0.40
codegen_flags: <defaults>
</compile_context>

<pallas_src>
import functools
import math

import jax
import jax.numpy as jnp
from jax.experimental import pallas as pl
from jax.experimental.pallas import tpu as pltpu

BN_EPS = 1e-5
_LANE = 128


def _round_up(n: int, m: int) -> int:
    return ((n + m - 1) // m) * m


# --------------------------------------------------------------- stage 1 ----
def _stage1_train_kernel(x_ref, xadd_ref,
                         enc_w_ref, enc_b_ref,
                         base_w_ref, base_b_ref,
                         ae_w_ref, ae_b_ref,
                         base_out_ref, emb_out_ref, h_out_ref):
    f32 = jnp.float32
    # encoder: Linear + ReLU (synthetic encoder); bf16 operands, f32 accumulate
    emb = jnp.dot(x_ref[...], enc_w_ref[...], preferred_element_type=f32) + enc_b_ref[...]
    emb = jnp.maximum(emb, 0.0)
    emb_bf = emb.astype(jnp.bfloat16)
    # base_predictor (MLPHead layer=0): Linear on the (detached) embedding
    base_out_ref[...] = (
        jnp.dot(emb_bf, base_w_ref[...], preferred_element_type=f32) + base_b_ref[...]
    )
    # stash embedding for the BN-dependent tail (stage 2)
    emb_out_ref[...] = emb_bf
    # add_encoder Linear (its BatchNorm needs global batch stats -> stage 2)
    h_out_ref[...] = (
        jnp.dot(xadd_ref[...], ae_w_ref[...], preferred_element_type=f32) + ae_b_ref[...]
    )


def _stage1_eval_kernel(x_ref, enc_w_ref, enc_b_ref, base_w_ref, base_b_ref,
                        base_out_ref):
    f32 = jnp.float32
    emb = jnp.dot(x_ref[...], enc_w_ref[...], preferred_element_type=f32) + enc_b_ref[...]
    emb = jnp.maximum(emb, 0.0).astype(jnp.bfloat16)
    base_out_ref[...] = (
        jnp.dot(emb, base_w_ref[...], preferred_element_type=f32) + base_b_ref[...]
    )


# --------------------------------------------------------------- stage 2 ----
def _stage2_kernel(emb_ref, h_ref,
                   ae_g_ref, ae_be_ref,
                   ap1_w_ref, ap1_b_ref, ap1_g_ref, ap1_be_ref,
                   ap2_w_ref, ap2_b_ref,
                   add_out_ref, *, split):
    f32 = jnp.float32

    def bn(h, g, b):
        # PyTorch BatchNorm1d training semantics: biased variance, eps=1e-5.
        mu = jnp.mean(h, axis=0, keepdims=True)
        var = jnp.mean((h - mu) * (h - mu), axis=0, keepdims=True)
        return (h - mu) * jax.lax.rsqrt(var + BN_EPS) * g + b

    # add_encoder tail: BatchNorm1d (training-mode batch stats) + ReLU
    add_emb = jnp.maximum(bn(h_ref[...], ae_g_ref[...], ae_be_ref[...]), 0.0)
    # add_predictor: Linear(cat(emb, add_emb)) as a split matmul, BN, ReLU, Linear
    h2 = (
        jnp.dot(emb_ref[...], ap1_w_ref[:split, :], preferred_element_type=f32)
        + jnp.dot(add_emb.astype(jnp.bfloat16), ap1_w_ref[split:, :],
                  preferred_element_type=f32)
        + ap1_b_ref[...]
    )
    h2 = jnp.maximum(bn(h2, ap1_g_ref[...], ap1_be_ref[...]), 0.0)
    add_out_ref[...] = (
        jnp.dot(h2.astype(jnp.bfloat16), ap2_w_ref[...], preferred_element_type=f32)
        + ap2_b_ref[...]
    )


# --------------------------------------------------------------- wrapper ----
def _pad2(a, rows, cols, dtype):
    a = jnp.asarray(a, dtype)
    return jnp.pad(a, ((0, rows - a.shape[0]), (0, cols - a.shape[1])))


def _pad_row(v, cols, fill=0.0):
    v = jnp.asarray(v, jnp.float32).reshape(1, -1)
    return jnp.pad(v, ((0, 0), (0, cols - v.shape[1])), constant_values=fill)


def _bytes(arrs, out_shapes):
    n = 0
    for a in arrs:
        n += int(a.size) * jnp.dtype(a.dtype).itemsize
    for s in out_shapes:
        n += math.prod(s.shape) * jnp.dtype(s.dtype).itemsize
    return int(n)


def tram_forward(x, x_add, params, train=True):
    """Pallas-backed forward of TRAM_Ordinal_Model.

    train=True  -> (base_prediction, add_prediction)
    train=False -> base_prediction
    """
    bf16 = jnp.bfloat16
    B = x.shape[0]
    x_flat = x.reshape(B, -1)                     # = encoder_output.view(B, -1)
    din = x_flat.shape[1]
    enc_out = params["enc_w"].shape[1]
    num_cat = params["base_w"].shape[1]
    add_in = params["ae_w"].shape[0]
    add_emb_dim = params["ae_w"].shape[1]
    add_hid = params["ap1_w"].shape[1]
    ord_m1 = params["ap2_w"].shape[1]

    # lane-dense padded dims (multiples of 128) -> unmasked stores everywhere
    DIN_P = _round_up(din, _LANE)
    ENC_P = _round_up(enc_out, _LANE)
    ADD_IN_P = _round_up(add_in, _LANE)
    ADD_EMB_P = _round_up(add_emb_dim, _LANE)
    HID_P = _round_up(add_hid, _LANE)
    OUT1_P = _round_up(num_cat, _LANE)
    OUT2_P = _round_up(ord_m1, _LANE)

    # batch tiling: 256-row MXU-sized tiles; small batches pad to 16 (bf16 pack)
    TB = min(256, _round_up(B, 16))
    B_pad = _round_up(B, TB)
    grid = (B_pad // TB,)

    x_p = _pad2(x_flat, B_pad, DIN_P, bf16)
    enc_w = _pad2(params["enc_w"], DIN_P, ENC_P, bf16)
    enc_b = _pad_row(params["enc_b"], ENC_P)
    base_w = _pad2(params["base_w"], ENC_P, OUT1_P, bf16)
    base_b = _pad_row(params["base_b"], OUT1_P)

    tiled = lambda cols: pl.BlockSpec((TB, cols), lambda i: (i, 0))
    resident = lambda shape: pl.BlockSpec(shape, lambda i: (0, 0))

    if not train:
        operands = (x_p, enc_w, enc_b, base_w, base_b)
        out_shape = jax.ShapeDtypeStruct((B_pad, OUT1_P), jnp.float32)
        flops = 2 * B_pad * (DIN_P * ENC_P + ENC_P * OUT1_P)
        base_pad = pl.pallas_call(
            _stage1_eval_kernel,
            grid=grid,
            in_specs=[tiled(DIN_P),
                      resident(enc_w.shape), resident(enc_b.shape),
                      resident(base_w.shape), resident(base_b.shape)],
            out_specs=pl.BlockSpec((TB, OUT1_P), lambda i: (i, 0)),
            out_shape=out_shape,
            compiler_params=pltpu.CompilerParams(
                dimension_semantics=("parallel",),
                vmem_limit_bytes=48 * 1024 * 1024),
            cost_estimate=pl.CostEstimate(
                flops=flops, transcendentals=0,
                bytes_accessed=_bytes(operands, (out_shape,))),
        )(*operands)
        return base_pad[:B, :num_cat]

    # ------------------------------- train path -----------------------------
    xa_p = _pad2(x_add, B_pad, ADD_IN_P, bf16)
    ae_w = _pad2(params["ae_w"], ADD_IN_P, ADD_EMB_P, bf16)
    ae_b = _pad_row(params["ae_b"], ADD_EMB_P)
    ae_g = _pad_row(params["ae_gamma"], ADD_EMB_P, fill=1.0)
    ae_be = _pad_row(params["ae_beta"], ADD_EMB_P)

    # ap1_w passed once, laid out so encoder rows start at 0 and add rows start
    # at ENC_P; the kernel takes static slices (zero-cost views).  Padded rows
    # are zero and padded add_emb channels are exactly zero, so the math is exact.
    ap1_w_f = jnp.asarray(params["ap1_w"], jnp.float32)
    ap1_w = jnp.zeros((ENC_P + ADD_EMB_P, HID_P), jnp.float32)
    ap1_w = ap1_w.at[:enc_out, :add_hid].set(ap1_w_f[:enc_out])
    ap1_w = ap1_w.at[ENC_P:ENC_P + add_emb_dim, :add_hid].set(ap1_w_f[enc_out:])
    ap1_w = ap1_w.astype(bf16)
    ap1_b = _pad_row(params["ap1_b"], HID_P)
    ap1_g = _pad_row(params["ap1_gamma"], HID_P, fill=1.0)
    ap1_be = _pad_row(params["ap1_beta"], HID_P)
    ap2_w = _pad2(params["ap2_w"], HID_P, OUT2_P, bf16)
    ap2_b = _pad_row(params["ap2_b"], OUT2_P)

    # stage 1: batch-tiled encoder + base head + add_encoder Linear
    s1_operands = (x_p, xa_p, enc_w, enc_b, base_w, base_b, ae_w, ae_b)
    s1_out_shapes = (
        jax.ShapeDtypeStruct((B_pad, OUT1_P), jnp.float32),    # base logits (padded)
        jax.ShapeDtypeStruct((B_pad, ENC_P), bf16),            # encoder embedding
        jax.ShapeDtypeStruct((B_pad, ADD_EMB_P), jnp.float32), # add_encoder pre-BN
    )
    s1_flops = 2 * B_pad * (DIN_P * ENC_P + ENC_P * OUT1_P + ADD_IN_P * ADD_EMB_P)
    base_pad, emb, h = pl.pallas_call(
        _stage1_train_kernel,
        grid=grid,
        in_specs=[tiled(DIN_P), tiled(ADD_IN_P),
                  resident(enc_w.shape), resident(enc_b.shape),
                  resident(base_w.shape), resident(base_b.shape),
                  resident(ae_w.shape), resident(ae_b.shape)],
        out_specs=(pl.BlockSpec((TB, OUT1_P), lambda i: (i, 0)),
                   pl.BlockSpec((TB, ENC_P), lambda i: (i, 0)),
                   pl.BlockSpec((TB, ADD_EMB_P), lambda i: (i, 0))),
        out_shape=s1_out_shapes,
        compiler_params=pltpu.CompilerParams(
            dimension_semantics=("parallel",),
            vmem_limit_bytes=48 * 1024 * 1024),
        cost_estimate=pl.CostEstimate(
            flops=s1_flops, transcendentals=0,
            bytes_accessed=_bytes(s1_operands, s1_out_shapes)),
    )(*s1_operands)

    # stage 2: BatchNorm needs *global* batch statistics, so run one block over
    # the real rows only (padded rows would corrupt the stats).  Everything here
    # is [B, <=a few hundred] wide, so a single block is cheap and exact.
    emb = emb[:B]
    h = h[:B]
    s2_operands = (emb, h, ae_g, ae_be, ap1_w, ap1_b, ap1_g, ap1_be, ap2_w, ap2_b)
    s2_out_shape = jax.ShapeDtypeStruct((B, OUT2_P), jnp.float32)
    s2_flops = 2 * B * (ENC_P * HID_P + ADD_EMB_P * HID_P + HID_P * OUT2_P)
    full = lambda a: pl.BlockSpec(a.shape, lambda i: (0, 0))
    add_pad = pl.pallas_call(
        functools.partial(_stage2_kernel, split=ENC_P),
        grid=(1,),
        in_specs=[full(a) for a in s2_operands],
        out_specs=pl.BlockSpec((B, OUT2_P), lambda i: (0, 0)),
        out_shape=s2_out_shape,
        compiler_params=pltpu.CompilerParams(
            dimension_semantics=("arbitrary",),
            vmem_limit_bytes=32 * 1024 * 1024),
        cost_estimate=pl.CostEstimate(
            flops=s2_flops, transcendentals=ADD_EMB_P + HID_P,
            bytes_accessed=_bytes(s2_operands, (s2_out_shape,))),
    )(*s2_operands)

    return base_pad[:B, :num_cat], add_pad[:, :ord_m1]


# ------------------------------------------------------------- reference ----
def tram_forward_ref(x, x_add, params):
    """Pure-JAX reference mirroring the PyTorch forward (train=True branch).

    Matmul operands are rounded to bf16 (with f32 accumulation) to mirror the
    kernel's deliberate precision policy; the structure, BN (training-mode batch
    statistics, eps=1e-5, biased variance) and ReLUs match PyTorch exactly.
    """
    bf, f32 = jnp.bfloat16, jnp.float32
    B = x.shape[0]
    xf = x.reshape(B, -1).astype(bf)
    emb = jnp.maximum(
        jnp.dot(xf, params["enc_w"].astype(bf), preferred_element_type=f32)
        + params["enc_b"], 0.0).astype(bf)
    base = (jnp.dot(emb, params["base_w"].astype(bf), preferred_element_type=f32)
            + params["base_b"])

    def bn(h, g, b):
        mu = h.mean(0, keepdims=True)
        var = ((h - mu) ** 2).mean(0, keepdims=True)
        return (h - mu) * jax.lax.rsqrt(var + BN_EPS) * g + b

    h = (jnp.dot(x_add.astype(bf), params["ae_w"].astype(bf),
                 preferred_element_type=f32) + params["ae_b"])
    add_emb = jnp.maximum(bn(h, params["ae_gamma"], params["ae_beta"]), 0.0).astype(bf)
    enc_out = params["enc_w"].shape[1]
    w_e = params["ap1_w"][:enc_out].astype(bf)
    w_a = params["ap1_w"][enc_out:].astype(bf)
    h2 = (jnp.dot(emb, w_e, preferred_element_type=f32)
          + jnp.dot(add_emb, w_a, preferred_element_type=f32) + params["ap1_b"])
    h2 = jnp.maximum(bn(h2, params["ap1_gamma"], params["ap1_beta"]), 0.0).astype(bf)
    add = (jnp.dot(h2, params["ap2_w"].astype(bf), preferred_element_type=f32)
           + params["ap2_b"])
    return base, add


if __name__ == "__main__":
    key = jax.random.PRNGKey(0)
    B, C, H, W = 2, 4, 16, 16        # encoder input (NCHW)
    ADD_IN = 8                       # add_input_dim
    NUM_CAT = 2                      # num_categories
    ORD_CAT = 8                      # ordinal_categories -> 7 outputs
    ENC_OUT = 128                    # base_predictor_input_dim (small)
    ADD_EMB = 64                     # add_encoder_embed_dim
    ADD_HID = 128                    # add_predictor_hidden_dim

    keys = jax.random.split(key, 12)

    def rnd(k, shape, scale=0.05):
        return (scale * jax.random.normal(k, shape)).astype(jnp.float32)

    params = dict(
        enc_w=rnd(keys[0], (C * H * W, ENC_OUT)),
        enc_b=rnd(keys[1], (ENC_OUT,)),
        base_w=rnd(keys[2], (ENC_OUT, NUM_CAT)),
        base_b=rnd(keys[3], (NUM_CAT,)),
        ae_w=rnd(keys[4], (ADD_IN, ADD_EMB)),
        ae_b=rnd(keys[5], (ADD_EMB,)),
        ae_gamma=jnp.ones((ADD_EMB,), jnp.float32),   # PyTorch BN default init
        ae_beta=jnp.zeros((ADD_EMB,), jnp.float32),
        ap1_w=rnd(keys[6], (ENC_OUT + ADD_EMB, ADD_HID)),
        ap1_b=rnd(keys[7], (ADD_HID,)),
        ap1_gamma=jnp.ones((ADD_HID,), jnp.float32),
        ap1_beta=jnp.zeros((ADD_HID,), jnp.float32),
        ap2_w=rnd(keys[8], (ADD_HID, ORD_CAT - 1)),
        ap2_b=rnd(keys[9], (ORD_CAT - 1,)),
    )

    x = rnd(keys[10], (B, C, H, W), scale=1.0)
    x_add = rnd(keys[11], (B, ADD_IN), scale=1.0)

    # train path (base + ordinal add head)
    base_pred, add_pred = tram_forward(x, x_add, params, train=True)
    jax.block_until_ready((base_pred, add_pred))

    # eval path (base only, add branch skipped entirely)
    base_eval = tram_forward(x, x_add, params, train=False)
    jax.block_until_ready(base_eval)

    ref_base, ref_add = tram_forward_ref(x, x_add, params)
    assert base_pred.shape == (B, NUM_CAT) and add_pred.shape == (B, ORD_CAT - 1)
    assert base_eval.shape == (B, NUM_CAT)
    assert jnp.allclose(base_pred, ref_base, atol=5e-3, rtol=5e-3)
    assert jnp.allclose(base_eval, ref_base, atol=5e-3, rtol=5e-3)
    assert jnp.allclose(add_pred, ref_add, atol=5e-3, rtol=5e-3)

    print("KERNEL_OK")
</pallas_src>

<mosaic_0001>
module attributes {stable_mosaic.version = 11 : i64} {
  func.func @_stage1_train_kernel(%arg0: i32, %arg1: memref<16x1024xbf16, #tpu.memory_space<vmem>>, %arg2: memref<16x128xbf16, #tpu.memory_space<vmem>>, %arg3: memref<1024x128xbf16, #tpu.memory_space<vmem>>, %arg4: memref<1x128xf32, #tpu.memory_space<vmem>>, %arg5: memref<128x128xbf16, #tpu.memory_space<vmem>>, %arg6: memref<1x128xf32, #tpu.memory_space<vmem>>, %arg7: memref<128x128xbf16, #tpu.memory_space<vmem>>, %arg8: memref<1x128xf32, #tpu.memory_space<vmem>>, %arg9: memref<16x128xf32, #tpu.memory_space<vmem>>, %arg10: memref<16x128xbf16, #tpu.memory_space<vmem>>, %arg11: memref<16x128xf32, #tpu.memory_space<vmem>>) attributes {dimension_semantics = [#tpu.dimension_semantics<parallel>], iteration_bounds = array<i64: 1>, scalar_prefetch = 0 : i64, scratch_operands = 0 : i64, tpu.core_type = #tpu.core_type<tc>, window_params = [{transform_indices = @transform_0, window_bounds = array<i64: 16, 1024>}, {transform_indices = @transform_1, window_bounds = array<i64: 16, 128>}, {pipeline_mode = #tpu.pipeline_mode<synchronous>, transform_indices = @transform_2, window_bounds = array<i64: 1024, 128>}, {pipeline_mode = #tpu.pipeline_mode<synchronous>, transform_indices = @transform_3, window_bounds = array<i64: 1, 128>}, {pipeline_mode = #tpu.pipeline_mode<synchronous>, transform_indices = @transform_4, window_bounds = array<i64: 128, 128>}, {pipeline_mode = #tpu.pipeline_mode<synchronous>, transform_indices = @transform_5, window_bounds = array<i64: 1, 128>}, {pipeline_mode = #tpu.pipeline_mode<synchronous>, transform_indices = @transform_6, window_bounds = array<i64: 128, 128>}, {pipeline_mode = #tpu.pipeline_mode<synchronous>, transform_indices = @transform_7, window_bounds = array<i64: 1, 128>}, {transform_indices = @transform_8, window_bounds = array<i64: 16, 128>}, {transform_indices = @transform_9, window_bounds = array<i64: 16, 128>}, {transform_indices = @transform_10, window_bounds = array<i64: 16, 128>}]} {
    %c0 = arith.constant 0 : index
    %c0_0 = arith.constant 0 : index
    %0 = vector.load %arg1[%c0, %c0_0] : memref<16x1024xbf16, #tpu.memory_space<vmem>>, vector<16x1024xbf16>
    %c0_1 = arith.constant 0 : index
    %c0_2 = arith.constant 0 : index
    %1 = vector.load %arg3[%c0_1, %c0_2] : memref<1024x128xbf16, #tpu.memory_space<vmem>>, vector<1024x128xbf16>
    %cst = arith.constant dense<0.000000e+00> : vector<16x128xf32>
    %2 = tpu.matmul %0, %1, %cst {dimension_numbers = #tpu.dot_dimension_numbers<[1], [0], [0], [1], [0, 0, 1, 1], [], []>} : vector<16x1024xbf16>, vector<1024x128xbf16>, vector<16x128xf32> -> vector<16x128xf32>
    %c0_3 = arith.constant 0 : index
    %c0_4 = arith.constant 0 : index
    %3 = vector.load %arg4[%c0_3, %c0_4] : memref<1x128xf32, #tpu.memory_space<vmem>>, vector<1x128xf32>
    %4 = vector.broadcast %3 : vector<1x128xf32> to vector<16x128xf32>
    %5 = arith.addf %2, %4 : vector<16x128xf32>
    %cst_5 = arith.constant 0.000000e+00 : f32
    %6 = vector.broadcast %cst_5 : f32 to vector<16x128xf32>
    %7 = arith.maximumf %5, %6 : vector<16x128xf32>
    %8 = arith.truncf %7 : vector<16x128xf32> to vector<16x128xbf16>
    %c0_6 = arith.constant 0 : index
    %c0_7 = arith.constant 0 : index
    %9 = vector.load %arg5[%c0_6, %c0_7] : memref<128x128xbf16, #tpu.memory_space<vmem>>, vector<128x128xbf16>
    %cst_8 = arith.constant dense<0.000000e+00> : vector<16x128xf32>
    %10 = tpu.matmul %8, %9, %cst_8 {dimension_numbers = #tpu.dot_dimension_numbers<[1], [0], [0], [1], [0, 0, 1, 1], [], []>} : vector<16x128xbf16>, vector<128x128xbf16>, vector<16x128xf32> -> vector<16x128xf32>
    %c0_9 = arith.constant 0 : index
    %c0_10 = arith.constant 0 : index
    %11 = vector.load %arg6[%c0_9, %c0_10] : memref<1x128xf32, #tpu.memory_space<vmem>>, vector<1x128xf32>
    %12 = vector.broadcast %11 : vector<1x128xf32> to vector<16x128xf32>
    %13 = arith.addf %10, %12 : vector<16x128xf32>
    %c0_11 = arith.constant 0 : index
    %c0_12 = arith.constant 0 : index
    %14 = vector.load %arg9[%c0_11, %c0_12] : memref<16x128xf32, #tpu.memory_space<vmem>>, vector<16x128xf32>
    tpu.vector_store %arg9[%c0_11, %c0_12], %13 {strides = array<i32>} : memref<16x128xf32, #tpu.memory_space<vmem>>, vector<16x128xf32>,
    %c0_13 = arith.constant 0 : index
    %c0_14 = arith.constant 0 : index
    %15 = vector.load %arg10[%c0_13, %c0_14] : memref<16x128xbf16, #tpu.memory_space<vmem>>, vector<16x128xbf16>
    tpu.vector_store %arg10[%c0_13, %c0_14], %8 {strides = array<i32>} : memref<16x128xbf16, #tpu.memory_space<vmem>>, vector<16x128xbf16>,
    %c0_15 = arith.constant 0 : index
    %c0_16 = arith.constant 0 : index
    %16 = vector.load %arg2[%c0_15, %c0_16] : memref<16x128xbf16, #tpu.memory_space<vmem>>, vector<16x128xbf16>
    %c0_17 = arith.constant 0 : index
    %c0_18 = arith.constant 0 : index
    %17 = vector.load %arg7[%c0_17, %c0_18] : memref<128x128xbf16, #tpu.memory_space<vmem>>, vector<128x128xbf16>
    %cst_19 = arith.constant dense<0.000000e+00> : vector<16x128xf32>
    %18 = tpu.matmul %16, %17, %cst_19 {dimension_numbers = #tpu.dot_dimension_numbers<[1], [0], [0], [1], [0, 0, 1, 1], [], []>} : vector<16x128xbf16>, vector<128x128xbf16>, vector<16x128xf32> -> vector<16x128xf32>
    %c0_20 = arith.constant 0 : index
    %c0_21 = arith.constant 0 : index
    %19 = vector.load %arg8[%c0_20, %c0_21] : memref<1x128xf32, #tpu.memory_space<vmem>>, vector<1x128xf32>
    %20 = vector.broadcast %19 : vector<1x128xf32> to vector<16x128xf32>
    %21 = arith.addf %18, %20 : vector<16x128xf32>
    %c0_22 = arith.constant 0 : index
    %c0_23 = arith.constant 0 : index
    %22 = vector.load %arg11[%c0_22, %c0_23] : memref<16x128xf32, #tpu.memory_space<vmem>>, vector<16x128xf32>
    tpu.vector_store %arg11[%c0_22, %c0_23], %21 {strides = array<i32>} : memref<16x128xf32, #tpu.memory_space<vmem>>, vector<16x128xf32>,
    return
  }
  func.func @transform_0(%arg0: i32) -> (i32, i32) {
    %c0_i32 = arith.constant 0 : i32
    %c0_i32_0 = arith.constant 0 : i32
    return %arg0, %c0_i32 : i32, i32
  }
  func.func @transform_1(%arg0: i32) -> (i32, i32) {
    %c0_i32 = arith.constant 0 : i32
    %c0_i32_0 = arith.constant 0 : i32
    return %arg0, %c0_i32 : i32, i32
  }
  func.func @transform_2(%arg0: i32) -> (i32, i32) {
    %c0_i32 = arith.constant 0 : i32
    %c0_i32_0 = arith.constant 0 : i32
    %c0_i32_1 = arith.constant 0 : i32
    return %c0_i32, %c0_i32_0 : i32, i32
  }
  func.func @transform_3(%arg0: i32) -> (i32, i32) {
    %c0_i32 = arith.constant 0 : i32
    %c0_i32_0 = arith.constant 0 : i32
    %c0_i32_1 = arith.constant 0 : i32
    return %c0_i32, %c0_i32_0 : i32, i32
  }
  func.func @transform_4(%arg0: i32) -> (i32, i32) {
    %c0_i32 = arith.constant 0 : i32
    %c0_i32_0 = arith.constant 0 : i32
    %c0_i32_1 = arith.constant 0 : i32
    return %c0_i32, %c0_i32_0 : i32, i32
  }
  func.func @transform_5(%arg0: i32) -> (i32, i32) {
    %c0_i32 = arith.constant 0 : i32
    %c0_i32_0 = arith.constant 0 : i32
    %c0_i32_1 = arith.constant 0 : i32
    return %c0_i32, %c0_i32_0 : i32, i32
  }
  func.func @transform_6(%arg0: i32) -> (i32, i32) {
    %c0_i32 = arith.constant 0 : i32
    %c0_i32_0 = arith.constant 0 : i32
    %c0_i32_1 = arith.constant 0 : i32
    return %c0_i32, %c0_i32_0 : i32, i32
  }
  func.func @transform_7(%arg0: i32) -> (i32, i32) {
    %c0_i32 = arith.constant 0 : i32
    %c0_i32_0 = arith.constant 0 : i32
    %c0_i32_1 = arith.constant 0 : i32
    return %c0_i32, %c0_i32_0 : i32, i32
  }
  func.func @transform_8(%arg0: i32) -> (i32, i32) {
    %c0_i32 = arith.constant 0 : i32
    %c0_i32_0 = arith.constant 0 : i32
    return %arg0, %c0_i32 : i32, i32
  }
  func.func @transform_9(%arg0: i32) -> (i32, i32) {
    %c0_i32 = arith.constant 0 : i32
    %c0_i32_0 = arith.constant 0 : i32
    return %arg0, %c0_i32 : i32, i32
  }
  func.func @transform_10(%arg0: i32) -> (i32, i32) {
    %c0_i32 = arith.constant 0 : i32
    %c0_i32_0 = arith.constant 0 : i32
    return %arg0, %c0_i32 : i32, i32
  }
}

</mosaic_0001>

<llo_original>
// kernel: tpu_custom_call.1
$region0: #{tpu_custom_call.1}
  #allocation0 [shape = 'u32[]', space=smem, size = 0x4, offset = 0x4, fixed_abs, tag = 'smem constant byte address 0x4 - core index']
  #allocation1 [shape = 'u32[72,128]{1,0:T(1,128)}', space=vmem, size = 0x9000, scoped, tag = 'internal scratch']
  %s0 = inlined_call_operand.hbm [shape: bf16[16,1024], index: 0, kind: input, shape index: {}]
  %s1 = inlined_call_operand.hbm [shape: bf16[16,128], index: 1, kind: input, shape index: {}]
  %s2 = inlined_call_operand.hbm [shape: bf16[1024,128], index: 2, kind: input, shape index: {}]
  %s3 = inlined_call_operand.vmem [shape: f32[1,128], index: 3, kind: input, shape index: {}]
  %s4 = inlined_call_operand.hbm [shape: bf16[128,128], index: 4, kind: input, shape index: {}]
  %s5 = inlined_call_operand.vmem [shape: f32[1,128], index: 5, kind: input, shape index: {}]
  %s6 = inlined_call_operand.hbm [shape: bf16[128,128], index: 6, kind: input, shape index: {}]
  %s7 = inlined_call_operand.vmem [shape: f32[1,128], index: 7, kind: input, shape index: {}]
  %s8 = inlined_call_operand.hbm [shape: f32[16,128], index: 8, kind: output, shape index: {0}]
  %s9 = inlined_call_operand.hbm [shape: bf16[16,128], index: 9, kind: output, shape index: {1}]
  %s10 = inlined_call_operand.hbm [shape: f32[16,128], index: 10, kind: output, shape index: {2}]
  %11 = xla_tuple %s8, %s9, %s10
  %s12 = sld [smem:[#allocation0]]
  $region78: #{tpu_custom_call.1} parent=0
    _
  %s14 = ssub.s32 1, %s12
  %s15 = scalar_select 0, %s14, %s12
  $region1: #{tpu_custom_call.1} parent=0
    #allocation2 [shape = 'u8[32768]{0}', space=vmem, size = 0x8000, scoped, tag = 'input window, operand 0, single buffered']
    #allocation3 [shape = 's32[1]{0}', space=sflag, size = 0x4, scoped, tag = 'scoped memory for tpu_custom_call.1']
    #allocation4 [shape = 's32[1]{0}', space=sflag, size = 0x4, scoped, tag = 'scoped memory for tpu_custom_call.1']
    #allocation5 [shape = 'u8[4096]{0}', space=vmem, size = 0x1000, scoped, tag = 'input window, operand 1, single buffered']
    #allocation6 [shape = 's32[1]{0}', space=sflag, size = 0x4, scoped, tag = 'scoped memory for tpu_custom_call.1']
    #allocation7 [shape = 'u8[262144]{0}', space=vmem, size = 0x40000, scoped, tag = 'input window, operand 2, single buffered']
    #allocation8 [shape = 'u8[32768]{0}', space=vmem, size = 0x8000, scoped, tag = 'input window, operand 4, single buffered']
    #allocation9 [shape = 's32[1]{0}', space=sflag, size = 0x4, scoped, tag = 'scoped memory for tpu_custom_call.1']
    #allocation10 [shape = 'u8[32768]{0}', space=vmem, size = 0x8000, scoped, tag = 'input window, operand 6, single buffered']
    #allocation11 [shape = 'u8[8192]{0}', space=vmem, size = 0x2000, scoped, tag = 'output window, operand 0, single buffered']
    #allocation12 [shape = 'u8[4096]{0}', space=vmem, size = 0x1000, scoped, tag = 'output window, operand 1, single buffered']
    #allocation13 [shape = 's32[1]{0}', space=sflag, size = 0x4, scoped, tag = 'scoped memory for tpu_custom_call.1']
    #allocation14 [shape = 'u8[8192]{0}', space=vmem, size = 0x2000, scoped, tag = 'output window, operand 2, single buffered']
    %16 = vsyncpa [#allocation3], 0
    %17 = vsyncpa [#allocation6], 0
    %18 = vsyncpa [#allocation9], 0
    %19 = vsyncpa [#allocation4], 0
    %20 = vsyncpa [#allocation13], 0
    // Predicated region
    $region2: #{tpu_custom_call.1} parent=1 // pred_check
      _
    $region3: #{tpu_custom_call.1} parent=1 // pred_check_branch
      %22 = sbr.rel (0) target = $region5
    $region4: #{tpu_custom_call.1} parent=1 // pred_region
      %24 = vsyncadd [#allocation3], 0
      %s25 = sshll.u32 %s0, 4
      %s26 = int_to_ptr.hbm [resolvable:$true] %s25
      %s27 = sshll.u32 [#allocation2], 4
      %s28 = int_to_ptr.vmem [resolvable:$true] %s27
      %33 = dma.hbm_to_vmem [thread:$0]  %s26, 1024, %s28, [#allocation3], 512, 512, 32
    $region5: #{tpu_custom_call.1} parent=1 // pred_fallthru
      _
    // Predicated region
    $region6: #{tpu_custom_call.1} parent=1 // pred_check
      _
    $region7: #{tpu_custom_call.1} parent=1 // pred_check_branch
      %35 = sbr.rel (0) target = $region9
    $region8: #{tpu_custom_call.1} parent=1 // pred_region
      %37 = vsyncadd [#allocation6], 0
      %s38 = sshll.u32 %s1, 4
      %s39 = int_to_ptr.hbm [resolvable:$true] %s38
      %s40 = sshll.u32 [#allocation5], 4
      %s41 = int_to_ptr.vmem [resolvable:$true] %s40
      %46 = dma.hbm_to_vmem [thread:$0]  %s39, 128, %s41, [#allocation6], 64, 64, 4
    $region9: #{tpu_custom_call.1} parent=1 // pred_fallthru
      _
    // Predicated region
    $region10: #{tpu_custom_call.1} parent=1 // pred_check
      _
    $region11: #{tpu_custom_call.1} parent=1 // pred_check_branch
      %48 = sbr.rel (0) target = $region13
    $region12: #{tpu_custom_call.1} parent=1 // pred_region
      %50 = vsyncadd [#allocation6], 0
      %s51 = sshll.u32 %s2, 4
      %s52 = int_to_ptr.hbm [resolvable:$true] %s51
      %s53 = sshll.u32 [#allocation7], 4
      %s54 = int_to_ptr.vmem [resolvable:$true] %s53
      %59 = dma.hbm_to_vmem [thread:$0]  %s52, 8192, %s54, [#allocation6], 64, 64, 4
    $region13: #{tpu_custom_call.1} parent=1 // pred_fallthru
      _
    // Predicated region
    $region14: #{tpu_custom_call.1} parent=1 // pred_check
      _
    $region15: #{tpu_custom_call.1} parent=1 // pred_check_branch
      %61 = sbr.rel (0) target = $region17
    $region16: #{tpu_custom_call.1} parent=1 // pred_region
      _
    $region17: #{tpu_custom_call.1} parent=1 // pred_fallthru
      _
    // Predicated region
    $region18: #{tpu_custom_call.1} parent=1 // pred_check
      _
    $region19: #{tpu_custom_call.1} parent=1 // pred_check_branch
      %63 = sbr.rel (0) target = $region21
    $region20: #{tpu_custom_call.1} parent=1 // pred_region
      %65 = vsyncadd [#allocation9], 0
      %s66 = sshll.u32 %s4, 4
      %s67 = int_to_ptr.hbm [resolvable:$true] %s66
      %s68 = sshll.u32 [#allocation8], 4
      %s69 = int_to_ptr.vmem [resolvable:$true] %s68
      %74 = dma.hbm_to_vmem [thread:$0]  %s67, 1024, %s69, [#allocation9], 64, 64, 4
    $region21: #{tpu_custom_call.1} parent=1 // pred_fallthru
      _
    // Predicated region
    $region22: #{tpu_custom_call.1} parent=1 // pred_check
      _
    $region23: #{tpu_custom_call.1} parent=1 // pred_check_branch
      %76 = sbr.rel (0) target = $region25
    $region24: #{tpu_custom_call.1} parent=1 // pred_region
      _
    $region25: #{tpu_custom_call.1} parent=1 // pred_fallthru
      _
    // Predicated region
    $region26: #{tpu_custom_call.1} parent=1 // pred_check
      _
    $region27: #{tpu_custom_call.1} parent=1 // pred_check_branch
      %78 = sbr.rel (0) target = $region29
    $region28: #{tpu_custom_call.1} parent=1 // pred_region
      %80 = vsyncadd [#allocation9], 0
      %s81 = sshll.u32 %s6, 4
      %s82 = int_to_ptr.hbm [resolvable:$true] %s81
      %s83 = sshll.u32 [#allocation10], 4
      %s84 = int_to_ptr.vmem [resolvable:$true] %s83
      %89 = dma.hbm_to_vmem [thread:$0]  %s82, 1024, %s84, [#allocation9], 64, 64, 4
    $region29: #{tpu_custom_call.1} parent=1 // pred_fallthru
      _
    // Predicated region
    $region30: #{tpu_custom_call.1} parent=1 // pred_check
      _
    $region31: #{tpu_custom_call.1} parent=1 // pred_check_branch
      %91 = sbr.rel (0) target = $region33
    $region32: #{tpu_custom_call.1} parent=1 // pred_region
      _
    $region33: #{tpu_custom_call.1} parent=1 // pred_fallthru
      _
    // Predicated region
    $region34: #{tpu_custom_call.1} parent=1 // pred_check
      _
    $region35: #{tpu_custom_call.1} parent=1 // pred_check_branch
      %93 = sbr.rel (0) target = $region37
    $region36: #{tpu_custom_call.1} parent=1 // pred_region
      %95 = dma.done [#allocation3], 1024
    $region37: #{tpu_custom_call.1} parent=1 // pred_fallthru
      _
    // Predicated region
    $region38: #{tpu_custom_call.1} parent=1 // pred_check
      _
    $region39: #{tpu_custom_call.1} parent=1 // pred_check_branch
      %97 = sbr.rel (0) target = $region41
    $region40: #{tpu_custom_call.1} parent=1 // pred_region
      %99 = dma.done [#allocation6], 128
    $region41: #{tpu_custom_call.1} parent=1 // pred_fallthru
      _
    // Predicated region
    $region42: #{tpu_custom_call.1} parent=1 // pred_check
      _
    $region43: #{tpu_custom_call.1} parent=1 // pred_check_branch
      %101 = sbr.rel (0) target = $region45
    $region44: #{tpu_custom_call.1} parent=1 // pred_region
      %103 = dma.done [#allocation6], 8192
    $region45: #{tpu_custom_call.1} parent=1 // pred_fallthru
      _
    // Predicated region
    $region46: #{tpu_custom_call.1} parent=1 // pred_check
      _
    $region47: #{tpu_custom_call.1} parent=1 // pred_check_branch
      %105 = sbr.rel (0) target = $region49
    $region48: #{tpu_custom_call.1} parent=1 // pred_region
      %107 = dma.done [#allocation9], 1024
    $region49: #{tpu_custom_call.1} parent=1 // pred_fallthru
      _
    // Predicated region
    $region50: #{tpu_custom_call.1} parent=1 // pred_check
      _
    $region51: #{tpu_custom_call.1} parent=1 // pred_check_branch
      %109 = sbr.rel (0) target = $region53
    $region52: #{tpu_custom_call.1} parent=1 // pred_region
      %111 = dma.done [#allocation9], 1024
    $region53: #{tpu_custom_call.1} parent=1 // pred_fallthru
      _
    %v112 = vld [vmem:[#allocation2] sm:$0xff]
    %v113 = vld [vmem:[#allocation2 + $0x8] sm:$0xff]
    %v114 = vld [vmem:[#allocation2 + $0x10] sm:$0xff]
    %v115 = vld [vmem:[#allocation2 + $0x18] sm:$0xff]
    %v116 = vld [vmem:[#allocation2 + $0x20] sm:$0xff]
    %v117 = vld [vmem:[#allocation2 + $0x28] sm:$0xff]
    %v118 = vld [vmem:[#allocation2 + $0x30] sm:$0xff]
    %v119 = vld [vmem:[#allocation2 + $0x38] sm:$0xff]
    %v120 = vld [vmem:[#allocation7] sm:$0xf]
    %v121 = vld [vmem:[#allocation7 + $0x4] sm:$0xf]
    %v122 = vld [vmem:[#allocation7 + $0x8] sm:$0xf]
    %v123 = vld [vmem:[#allocation7 + $0xc] sm:$0xf]
    %v124 = vld [vmem:[#allocation7 + $0x10] sm:$0xf]
    %v125 = vld [vmem:[#allocation7 + $0x14] sm:$0xf]
    %v126 = vld [vmem:[#allocation7 + $0x18] sm:$0xf]
    %v127 = vld [vmem:[#allocation7 + $0x1c] sm:$0xf]
    %v128 = vld [vmem:[#allocation7 + $0x20] sm:$0xf]
    %v129 = vld [vmem:[#allocation7 + $0x24] sm:$0xf]
    %v130 = vld [vmem:[#allocation7 + $0x28] sm:$0xf]
    %v131 = vld [vmem:[#allocation7 + $0x2c] sm:$0xf]
    %v132 = vld [vmem:[#allocation7 + $0x30] sm:$0xf]
    %v133 = vld [vmem:[#allocation7 + $0x34] sm:$0xf]
    %v134 = vld [vmem:[#allocation7 + $0x38] sm:$0xf]
    %v135 = vld [vmem:[#allocation7 + $0x3c] sm:$0xf]
    %v136 = vld [vmem:[#allocation7 + $0x40] sm:$0xf]
    %v137 = vld [vmem:[#allocation7 + $0x44] sm:$0xf]
    %v138 = vld [vmem:[#allocation7 + $0x48] sm:$0xf]
    %v139 = vld [vmem:[#allocation7 + $0x4c] sm:$0xf]
    %v140 = vld [vmem:[#allocation7 + $0x50] sm:$0xf]
    %v141 = vld [vmem:[#allocation7 + $0x54] sm:$0xf]
    %v142 = vld [vmem:[#allocation7 + $0x58] sm:$0xf]
    %v143 = vld [vmem:[#allocation7 + $0x5c] sm:$0xf]
    %v144 = vld [vmem:[#allocation7 + $0x60] sm:$0xf]
    %v145 = vld [vmem:[#allocation7 + $0x64] sm:$0xf]
    %v146 = vld [vmem:[#allocation7 + $0x68] sm:$0xf]
    %v147 = vld [vmem:[#allocation7 + $0x6c] sm:$0xf]
    %v148 = vld [vmem:[#allocation7 + $0x70] sm:$0xf]
    %v149 = vld [vmem:[#allocation7 + $0x74] sm:$0xf]
    %v150 = vld [vmem:[#allocation7 + $0x78] sm:$0xf]
    %v151 = vld [vmem:[#allocation7 + $0x7c] sm:$0xf]
    %v152 = vld [vmem:[#allocation7 + $0x80] sm:$0xf]
    %v153 = vld [vmem:[#allocation7 + $0x84] sm:$0xf]
    %v154 = vld [vmem:[#allocation7 + $0x88] sm:$0xf]
    %v155 = vld [vmem:[#allocation7 + $0x8c] sm:$0xf]
    %v156 = vld [vmem:[#allocation7 + $0x90] sm:$0xf]
    %v157 = vld [vmem:[#allocation7 + $0x94] sm:$0xf]
    %v158 = vld [vmem:[#allocation7 + $0x98] sm:$0xf]
    %v159 = vld [vmem:[#allocation7 + $0x9c] sm:$0xf]
    %v160 = vld [vmem:[#allocation7 + $0xa0] sm:$0xf]
    %v161 = vld [vmem:[#allocation7 + $0xa4] sm:$0xf]
    %v162 = vld [vmem:[#allocation7 + $0xa8] sm:$0xf]
    %v163 = vld [vmem:[#allocation7 + $0xac] sm:$0xf]
    %v164 = vld [vmem:[#allocation7 + $0xb0] sm:$0xf]
    %v165 = vld [vmem:[#allocation7 + $0xb4] sm:$0xf]
    %v166 = vld [vmem:[#allocation7 + $0xb8] sm:$0xf]
    %v167 = vld [vmem:[#allocation7 + $0xbc] sm:$0xf]
    %v168 = vld [vmem:[#allocation7 + $0xc0] sm:$0xf]
    %v169 = vld [vmem:[#allocation7 + $0xc4] sm:$0xf]
    %v170 = vld [vmem:[#allocation7 + $0xc8] sm:$0xf]
    %v171 = vld [vmem:[#allocation7 + $0xcc] sm:$0xf]
    %v172 = vld [vmem:[#allocation7 + $0xd0] sm:$0xf]
    %v173 = vld [vmem:[#allocation7 + $0xd4] sm:$0xf]
    %v174 = vld [vmem:[#allocation7 + $0xd8] sm:$0xf]
    %v175 = vld [vmem:[#allocation7 + $0xdc] sm:$0xf]
    %v176 = vld [vmem:[#allocation7 + $0xe0] sm:$0xf]
    %v177 = vld [vmem:[#allocation7 + $0xe4] sm:$0xf]
    %v178 = vld [vmem:[#allocation7 + $0xe8] sm:$0xf]
    %v179 = vld [vmem:[#allocation7 + $0xec] sm:$0xf]
    %v180 = vld [vmem:[#allocation7 + $0xf0] sm:$0xf]
    %v181 = vld [vmem:[#allocation7 + $0xf4] sm:$0xf]
    %v182 = vld [vmem:[#allocation7 + $0xf8] sm:$0xf]
    %v183 = vld [vmem:[#allocation7 + $0xfc] sm:$0xf]
    %v184 = vld [vmem:[#allocation7 + $0x100] sm:$0xf]
    %v185 = vld [vmem:[#allocation7 + $0x104] sm:$0xf]
    %v186 = vld [vmem:[#allocation7 + $0x108] sm:$0xf]
    %v187 = vld [vmem:[#allocation7 + $0x10c] sm:$0xf]
    %v188 = vld [vmem:[#allocation7 + $0x110] sm:$0xf]
    %v189 = vld [vmem:[#allocation7 + $0x114] sm:$0xf]
    %v190 = vld [vmem:[#allocation7 + $0x118] sm:$0xf]
    %v191 = vld [vmem:[#allocation7 + $0x11c] sm:$0xf]
    %v192 = vld [vmem:[#allocation7 + $0x120] sm:$0xf]
    %v193 = vld [vmem:[#allocation7 + $0x124] sm:$0xf]
    %v194 = vld [vmem:[#allocation7 + $0x128] sm:$0xf]
    %v195 = vld [vmem:[#allocation7 + $0x12c] sm:$0xf]
    %v196 = vld [vmem:[#allocation7 + $0x130] sm:$0xf]
    %v197 = vld [vmem:[#allocation7 + $0x134] sm:$0xf]
    %v198 = vld [vmem:[#allocation7 + $0x138] sm:$0xf]
    %v199 = vld [vmem:[#allocation7 + $0x13c] sm:$0xf]
    %v200 = vld [vmem:[#allocation7 + $0x140] sm:$0xf]
    %v201 = vld [vmem:[#allocation7 + $0x144] sm:$0xf]
    %v202 = vld [vmem:[#allocation7 + $0x148] sm:$0xf]
    %v203 = vld [vmem:[#allocation7 + $0x14c] sm:$0xf]
    %v204 = vld [vmem:[#allocation7 + $0x150] sm:$0xf]
    %v205 = vld [vmem:[#allocation7 + $0x154] sm:$0xf]
    %v206 = vld [vmem:[#allocation7 + $0x158] sm:$0xf]
    %v207 = vld [vmem:[#allocation7 + $0x15c] sm:$0xf]
    %v208 = vld [vmem:[#allocation7 + $0x160] sm:$0xf]
    %v209 = vld [vmem:[#allocation7 + $0x164] sm:$0xf]
    %v210 = vld [vmem:[#allocation7 + $0x168] sm:$0xf]
    %v211 = vld [vmem:[#allocation7 + $0x16c] sm:$0xf]
    %v212 = vld [vmem:[#allocation7 + $0x170] sm:$0xf]
    %v213 = vld [vmem:[#allocation7 + $0x174] sm:$0xf]
    %v214 = vld [vmem:[#allocation7 + $0x178] sm:$0xf]
    %v215 = vld [vmem:[#allocation7 + $0x17c] sm:$0xf]
    %v216 = vld [vmem:[#allocation7 + $0x180] sm:$0xf]
    %v217 = vld [vmem:[#allocation7 + $0x184] sm:$0xf]
    %v218 = vld [vmem:[#allocation7 + $0x188] sm:$0xf]
    %v219 = vld [vmem:[#allocation7 + $0x18c] sm:$0xf]
    %v220 = vld [vmem:[#allocation7 + $0x190] sm:$0xf]
    %v221 = vld [vmem:[#allocation7 + $0x194] sm:$0xf]
    %v222 = vld [vmem:[#allocation7 + $0x198] sm:$0xf]
    %v223 = vld [vmem:[#allocation7 + $0x19c] sm:$0xf]
    %v224 = vld [vmem:[#allocation7 + $0x1a0] sm:$0xf]
    %v225 = vld [vmem:[#allocation7 + $0x1a4] sm:$0xf]
    %v226 = vld [vmem:[#allocation7 + $0x1a8] sm:$0xf]
    %v227 = vld [vmem:[#allocation7 + $0x1ac] sm:$0xf]
    %v228 = vld [vmem:[#allocation7 + $0x1b0] sm:$0xf]
    %v229 = vld [vmem:[#allocation7 + $0x1b4] sm:$0xf]
    %v230 = vld [vmem:[#allocation7 + $0x1b8] sm:$0xf]
    %v231 = vld [vmem:[#allocation7 + $0x1bc] sm:$0xf]
    %v232 = vld [vmem:[#allocation7 + $0x1c0] sm:$0xf]
    %v233 = vld [vmem:[#allocation7 + $0x1c4] sm:$0xf]
    %v234 = vld [vmem:[#allocation7 + $0x1c8] sm:$0xf]
    %v235 = vld [vmem:[#allocation7 + $0x1cc] sm:$0xf]
    %v236 = vld [vmem:[#allocation7 + $0x1d0] sm:$0xf]
    %v237 = vld [vmem:[#allocation7 + $0x1d4] sm:$0xf]
    %v238 = vld [vmem:[#allocation7 + $0x1d8] sm:$0xf]
    %v239 = vld [vmem:[#allocation7 + $0x1dc] sm:$0xf]
    %v240 = vld [vmem:[#allocation7 + $0x1e0] sm:$0xf]
    %v241 = vld [vmem:[#allocation7 + $0x1e4] sm:$0xf]
    %v242 = vld [vmem:[#allocation7 + $0x1e8] sm:$0xf]
    %v243 = vld [vmem:[#allocation7 + $0x1ec] sm:$0xf]
    %v244 = vld [vmem:[#allocation7 + $0x1f0] sm:$0xf]
    %v245 = vld [vmem:[#allocation7 + $0x1f4] sm:$0xf]
    %v246 = vld [vmem:[#allocation7 + $0x1f8] sm:$0xf]
    %v247 = vld [vmem:[#allocation7 + $0x1fc] sm:$0xf]
    %v248 = vld [vmem:[%s3] sm:$0x1]
    %v250 = vperm.slane %v248, 0
    %v260 = vunpack.c.l.b16 %v112
    %v261 = vunpack.c.h.b16 %v112
    %v262 = vunpack.c.l.b16 %v113
    %v263 = vunpack.c.h.b16 %v113
    %v264 = vunpack.c.l.b16 %v114
    %v265 = vunpack.c.h.b16 %v114
    %v266 = vunpack.c.l.b16 %v115
    %v267 = vunpack.c.h.b16 %v115
    %v268 = vunpack.c.l.b16 %v116
    %v269 = vunpack.c.h.b16 %v116
    %v270 = vunpack.c.l.b16 %v117
    %v271 = vunpack.c.h.b16 %v117
    %v272 = vunpack.c.l.b16 %v118
    %v273 = vunpack.c.h.b16 %v118
    %v274 = vunpack.c.l.b16 %v119
    %v275 = vunpack.c.h.b16 %v119
    %v276 = vpack.c.b16 %v268, %v260
    %v277 = vpack.c.b16 %v269, %v261
    %v278 = vpack.c.b16 %v270, %v262
    %v279 = vpack.c.b16 %v271, %v263
    %v280 = vpack.c.b16 %v272, %v264
    %v281 = vpack.c.b16 %v273, %v265
    %v282 = vpack.c.b16 %v274, %v266
    %v283 = vpack.c.b16 %v275, %v267
    %v420 = vunpack.c.l.b16 %v120
    %v421 = vunpack.c.l.b16 %v121
    %v422 = vunpack.c.l.b16 %v122
    %v423 = vunpack.c.l.b16 %v123
    %v424 = vunpack.c.l.b16 %v124
    %v425 = vunpack.c.l.b16 %v125
    %v426 = vunpack.c.l.b16 %v126
    %v427 = vunpack.c.l.b16 %v127
    %v428 = vunpack.c.l.b16 %v128
    %v429 = vunpack.c.l.b16 %v129
    %v430 = vunpack.c.l.b16 %v130
    %v431 = vunpack.c.l.b16 %v131
    %v432 = vunpack.c.l.b16 %v132
    %v433 = vunpack.c.l.b16 %v133
    %v434 = vunpack.c.l.b16 %v134
    %v435 = vunpack.c.l.b16 %v135
    %v436 = vunpack.c.l.b16 %v136
    %v437 = vunpack.c.l.b16 %v137
    %v438 = vunpack.c.l.b16 %v138
    %v439 = vunpack.c.l.b16 %v139
    %v440 = vunpack.c.l.b16 %v140
    %v441 = vunpack.c.l.b16 %v141
    %v442 = vunpack.c.l.b16 %v142
    %v443 = vunpack.c.l.b16 %v143
    %v444 = vunpack.c.l.b16 %v144
    %v445 = vunpack.c.l.b16 %v145
    %v446 = vunpack.c.l.b16 %v146
    %v447 = vunpack.c.l.b16 %v147
    %v448 = vunpack.c.l.b16 %v148
    %v449 = vunpack.c.l.b16 %v149
    %v450 = vunpack.c.l.b16 %v150
    %v451 = vunpack.c.l.b16 %v151
    %v452 = vunpack.c.l.b16 %v152
    %v453 = vunpack.c.l.b16 %v153
    %v454 = vunpack.c.l.b16 %v154
    %v455 = vunpack.c.l.b16 %v155
    %v456 = vunpack.c.l.b16 %v156
    %v457 = vunpack.c.l.b16 %v157
    %v458 = vunpack.c.l.b16 %v158
    %v459 = vunpack.c.l.b16 %v159
    %v460 = vunpack.c.l.b16 %v160
    %v461 = vunpack.c.l.b16 %v161
    %v462 = vunpack.c.l.b16 %v162
    %v463 = vunpack.c.l.b16 %v163
    %v464 = vunpack.c.l.b16 %v164
    %v465 = vunpack.c.l.b16 %v165
    %v466 = vunpack.c.l.b16 %v166
    %v467 = vunpack.c.l.b16 %v167
    %v468 = vunpack.c.l.b16 %v168
    %v469 = vunpack.c.l.b16 %v169
    %v470 = vunpack.c.l.b16 %v170
    %v471 = vunpack.c.l.b16 %v171
    %v472 = vunpack.c.l.b16 %v172
    %v473 = vunpack.c.l.b16 %v173
    %v474 = vunpack.c.l.b16 %v174
    %v475 = vunpack.c.l.b16 %v175
    %v476 = vunpack.c.l.b16 %v176
    %v477 = vunpack.c.l.b16 %v177
    %v478 = vunpack.c.l.b16 %v178
    %v479 = vunpack.c.l.b16 %v179
    %v480 = vunpack.c.l.b16 %v180
    %v481 = vunpack.c.l.b16 %v181
    %v482 = vunpack.c.l.b16 %v182
    %v483 = vunpack.c.l.b16 %v183
    %v484 = vunpack.c.l.b16 %v184
    %v485 = vunpack.c.l.b16 %v185
    %v486 = vunpack.c.l.b16 %v186
    %v487 = vunpack.c.l.b16 %v187
    %v488 = vunpack.c.l.b16 %v188
    %v489 = vunpack.c.l.b16 %v189
    %v490 = vunpack.c.l.b16 %v190
    %v491 = vunpack.c.l.b16 %v191
    %v492 = vunpack.c.l.b16 %v192
    %v493 = vunpack.c.l.b16 %v193
    %v494 = vunpack.c.l.b16 %v194
    %v495 = vunpack.c.l.b16 %v195
    %v496 = vunpack.c.l.b16 %v196
    %v497 = vunpack.c.l.b16 %v197
    %v498 = vunpack.c.l.b16 %v198
    %v499 = vunpack.c.l.b16 %v199
    %v500 = vunpack.c.l.b16 %v200
    %v501 = vunpack.c.l.b16 %v201
    %v502 = vunpack.c.l.b16 %v202
    %v503 = vunpack.c.l.b16 %v203
    %v504 = vunpack.c.l.b16 %v204
    %v505 = vunpack.c.l.b16 %v205
    %v506 = vunpack.c.l.b16 %v206
    %v507 = vunpack.c.l.b16 %v207
    %v508 = vunpack.c.l.b16 %v208
    %v509 = vunpack.c.l.b16 %v209
    %v510 = vunpack.c.l.b16 %v210
    %v511 = vunpack.c.l.b16 %v211
    %v512 = vunpack.c.l.b16 %v212
    %v513 = vunpack.c.l.b16 %v213
    %v514 = vunpack.c.l.b16 %v214
    %v515 = vunpack.c.l.b16 %v215
    %v516 = vunpack.c.l.b16 %v216
    %v517 = vunpack.c.l.b16 %v217
    %v518 = vunpack.c.l.b16 %v218
    %v519 = vunpack.c.l.b16 %v219
    %v520 = vunpack.c.l.b16 %v220
    %v521 = vunpack.c.l.b16 %v221
    %v522 = vunpack.c.l.b16 %v222
    %v523 = vunpack.c.l.b16 %v223
    %v524 = vunpack.c.l.b16 %v224
    %v525 = vunpack.c.l.b16 %v225
    %v526 = vunpack.c.l.b16 %v226
    %v527 = vunpack.c.l.b16 %v227
    %v528 = vunpack.c.l.b16 %v228
    %v529 = vunpack.c.l.b16 %v229
    %v530 = vunpack.c.l.b16 %v230
    %v531 = vunpack.c.l.b16 %v231
    %v532 = vunpack.c.l.b16 %v232
    %v533 = vunpack.c.l.b16 %v233
    %v534 = vunpack.c.l.b16 %v234
    %v535 = vunpack.c.l.b16 %v235
    %v536 = vunpack.c.l.b16 %v236
    %v537 = vunpack.c.l.b16 %v237
    %v538 = vunpack.c.l.b16 %v238
    %v539 = vunpack.c.l.b16 %v239
    %v540 = vunpack.c.l.b16 %v240
    %v541 = vunpack.c.l.b16 %v241
    %v542 = vunpack.c.l.b16 %v242
    %v543 = vunpack.c.l.b16 %v243
    %v544 = vunpack.c.l.b16 %v244
    %v545 = vunpack.c.l.b16 %v245
    %v546 = vunpack.c.l.b16 %v246
    %v547 = vunpack.c.l.b16 %v247
    %v548 = vpack.c.b16 %v421, %v420
    %v549 = vpack.c.b16 %v423, %v422
    %v550 = vpack.c.b16 %v425, %v424
    %v551 = vpack.c.b16 %v427, %v426
    %v552 = vpack.c.b16 %v429, %v428
    %v553 = vpack.c.b16 %v431, %v430
    %v554 = vpack.c.b16 %v433, %v432
    %v555 = vpack.c.b16 %v435, %v434
    %v556 = vpack.c.b16 %v437, %v436
    %v557 = vpack.c.b16 %v439, %v438
    %v558 = vpack.c.b16 %v441, %v440
    %v559 = vpack.c.b16 %v443, %v442
    %v560 = vpack.c.b16 %v445, %v444
    %v561 = vpack.c.b16 %v447, %v446
    %v562 = vpack.c.b16 %v449, %v448
    %v563 = vpack.c.b16 %v451, %v450
    %v564 = vpack.c.b16 %v453, %v452
    %v565 = vpack.c.b16 %v455, %v454
    %v566 = vpack.c.b16 %v457, %v456
    %v567 = vpack.c.b16 %v459, %v458
    %v568 = vpack.c.b16 %v461, %v460
    %v569 = vpack.c.b16 %v463, %v462
    %v570 = vpack.c.b16 %v465, %v464
    %v571 = vpack.c.b16 %v467, %v466
    %v572 = vpack.c.b16 %v469, %v468
    %v573 = vpack.c.b16 %v471, %v470
    %v574 = vpack.c.b16 %v473, %v472
    %v575 = vpack.c.b16 %v475, %v474
    %v576 = vpack.c.b16 %v477, %v476
    %v577 = vpack.c.b16 %v479, %v478
    %v578 = vpack.c.b16 %v481, %v480
    %v579 = vpack.c.b16 %v483, %v482
    %v580 = vpack.c.b16 %v485, %v484
    %v581 = vpack.c.b16 %v487, %v486
    %v582 = vpack.c.b16 %v489, %v488
    %v583 = vpack.c.b16 %v491, %v490
    %v584 = vpack.c.b16 %v493, %v492
    %v585 = vpack.c.b16 %v495, %v494
    %v586 = vpack.c.b16 %v497, %v496
    %v587 = vpack.c.b16 %v499, %v498
    %v588 = vpack.c.b16 %v501, %v500
    %v589 = vpack.c.b16 %v503, %v502
    %v590 = vpack.c.b16 %v505, %v504
    %v591 = vpack.c.b16 %v507, %v506
    %v592 = vpack.c.b16 %v509, %v508
    %v593 = vpack.c.b16 %v511, %v510
    %v594 = vpack.c.b16 %v513, %v512
    %v595 = vpack.c.b16 %v515, %v514
    %v596 = vpack.c.b16 %v517, %v516
    %v597 = vpack.c.b16 %v519, %v518
    %v598 = vpack.c.b16 %v521, %v520
    %v599 = vpack.c.b16 %v523, %v522
    %v600 = vpack.c.b16 %v525, %v524
    %v601 = vpack.c.b16 %v527, %v526
    %v602 = vpack.c.b16 %v529, %v528
    %v603 = vpack.c.b16 %v531, %v530
    %v604 = vpack.c.b16 %v533, %v532
    %v605 = vpack.c.b16 %v535, %v534
    %v606 = vpack.c.b16 %v537, %v536
    %v607 = vpack.c.b16 %v539, %v538
    %v608 = vpack.c.b16 %v541, %v540
    %v609 = vpack.c.b16 %v543, %v542
    %v610 = vpack.c.b16 %v545, %v544
    %v611 = vpack.c.b16 %v547, %v546
    %676 = vmatpush.bf16.msra.mxu0 %v555
    %677 = vmatpush.bf16.msra.mxu0 %v554
    %678 = vmatpush.bf16.msra.mxu0 %v553
    %679 = vmatpush.bf16.msra.mxu0 %v552
    %680 = vmatpush.bf16.msra.mxu0 %v551
    %681 = vmatpush.bf16.msra.mxu0 %v550
    %682 = vmatpush.bf16.msra.mxu0 %v549
    %683 = vmatpush.bf16.msra.mxu0 %v548
    %684 = vmatmul.bf16.gmra.mxu0 %v276
    %v685 = vpop.f32.mrf.mxu0
    %v686 = vadd.f32 %v250, %v685
    %v687 = vpop.f32.mrf.mxu0
    %v688 = vadd.f32 %v250, %v687
    %689 = vdwg.mxu0
    %690 = vmatpush.bf16.msra.mxu0 %v563
    %691 = vmatpush.bf16.msra.mxu0 %v562
    %692 = vmatpush.bf16.msra.mxu0 %v561
    %693 = vmatpush.bf16.msra.mxu0 %v560
    %694 = vmatpush.bf16.msra.mxu0 %v559
    %695 = vmatpush.bf16.msra.mxu0 %v558
    %696 = vmatpush.bf16.msra.mxu0 %v557
    %697 = vmatpush.bf16.msra.mxu0 %v556
    %698 = vmatmul.bf16.gmra.mxu0 %v277
    %v699 = vpop.f32.mrf.mxu0
    %v700 = vadd.f32 %v686, %v699
    %v701 = vpop.f32.mrf.mxu0
    %v702 = vadd.f32 %v688, %v701
    %703 = vdwg.mxu0
    %704 = vmatpush.bf16.msra.mxu0 %v571
    %705 = vmatpush.bf16.msra.mxu0 %v570
    %706 = vmatpush.bf16.msra.mxu0 %v569
    %707 = vmatpush.bf16.msra.mxu0 %v568
    %708 = vmatpush.bf16.msra.mxu0 %v567
    %709 = vmatpush.bf16.msra.mxu0 %v566
    %710 = vmatpush.bf16.msra.mxu0 %v565
    %711 = vmatpush.bf16.msra.mxu0 %v564
    %712 = vmatmul.bf16.gmra.mxu0 %v278
    %v713 = vpop.f32.mrf.mxu0
    %v714 = vadd.f32 %v700, %v713
    %v715 = vpop.f32.mrf.mxu0
    %v716 = vadd.f32 %v702, %v715
    %717 = vdwg.mxu0
    %718 = vmatpush.bf16.msra.mxu0 %v579
    %719 = vmatpush.bf16.msra.mxu0 %v578
    %720 = vmatpush.bf16.msra.mxu0 %v577
    %721 = vmatpush.bf16.msra.mxu0 %v576
    %722 = vmatpush.bf16.msra.mxu0 %v575
    %723 = vmatpush.bf16.msra.mxu0 %v574
    %724 = vmatpush.bf16.msra.mxu0 %v573
    %725 = vmatpush.bf16.msra.mxu0 %v572
    %726 = vmatmul.bf16.gmra.mxu0 %v279
    %v727 = vpop.f32.mrf.mxu0
    %v728 = vadd.f32 %v714, %v727
    %v729 = vpop.f32.mrf.mxu0
    %v730 = vadd.f32 %v716, %v729
    %731 = vdwg.mxu0
    %732 = vmatpush.bf16.msra.mxu0 %v587
    %733 = vmatpush.bf16.msra.mxu0 %v586
    %734 = vmatpush.bf16.msra.mxu0 %v585
    %735 = vmatpush.bf16.msra.mxu0 %v584
    %736 = vmatpush.bf16.msra.mxu0 %v583
    %737 = vmatpush.bf16.msra.mxu0 %v582
    %738 = vmatpush.bf16.msra.mxu0 %v581
    %739 = vmatpush.bf16.msra.mxu0 %v580
    %740 = vmatmul.bf16.gmra.mxu0 %v280
    %v741 = vpop.f32.mrf.mxu0
    %v742 = vadd.f32 %v728, %v741
    %v743 = vpop.f32.mrf.mxu0
    %v744 = vadd.f32 %v730, %v743
    %745 = vdwg.mxu0
    %746 = vmatpush.bf16.msra.mxu0 %v595
    %747 = vmatpush.bf16.msra.mxu0 %v594
    %748 = vmatpush.bf16.msra.mxu0 %v593
    %749 = vmatpush.bf16.msra.mxu0 %v592
    %750 = vmatpush.bf16.msra.mxu0 %v591
    %751 = vmatpush.bf16.msra.mxu0 %v590
    %752 = vmatpush.bf16.msra.mxu0 %v589
    %753 = vmatpush.bf16.msra.mxu0 %v588
    %754 = vmatmul.bf16.gmra.mxu0 %v281
    %v755 = vpop.f32.mrf.mxu0
    %v756 = vadd.f32 %v742, %v755
    %v757 = vpop.f32.mrf.mxu0
    %v758 = vadd.f32 %v744, %v757
    %759 = vdwg.mxu0
    %760 = vmatpush.bf16.msra.mxu0 %v603
    %761 = vmatpush.bf16.msra.mxu0 %v602
    %762 = vmatpush.bf16.msra.mxu0 %v601
    %763 = vmatpush.bf16.msra.mxu0 %v600
    %764 = vmatpush.bf16.msra.mxu0 %v599
    %765 = vmatpush.bf16.msra.mxu0 %v598
    %766 = vmatpush.bf16.msra.mxu0 %v597
    %767 = vmatpush.bf16.msra.mxu0 %v596
    %768 = vmatmul.bf16.gmra.mxu0 %v282
    %v769 = vpop.f32.mrf.mxu0
    %v770 = vadd.f32 %v756, %v769
    %v771 = vpop.f32.mrf.mxu0
    %v772 = vadd.f32 %v758, %v771
    %773 = vdwg.mxu0
    %774 = vmatpush.bf16.msra.mxu0 %v611
    %775 = vmatpush.bf16.msra.mxu0 %v610
    %776 = vmatpush.bf16.msra.mxu0 %v609
    %777 = vmatpush.bf16.msra.mxu0 %v608
    %778 = vmatpush.bf16.msra.mxu0 %v607
    %779 = vmatpush.bf16.msra.mxu0 %v606
    %780 = vmatpush.bf16.msra.mxu0 %v605
    %781 = vmatpush.bf16.msra.mxu0 %v604
    %782 = vmatmul.bf16.gmra.mxu0 %v283
    %v783 = vpop.f32.mrf.mxu0
    %v784 = vadd.f32 %v770, %v783
    %v785 = vpop.f32.mrf.mxu0
    %v786 = vadd.f32 %v772, %v785
    %787 = vdwg.mxu0
    %v788 = vmax.f32 %v784, 0.0
    %v789 = vmax.f32 %v786, 0.0
    %v790 = vpack.c.bf16 %v788, %v788
    %v791 = vpack.c.bf16 %v789, %v789
    %v792 = vld [vmem:[#allocation8] sm:$0xf]
    %v793 = vld [vmem:[#allocation8 + $0x4] sm:$0xf]
    %v794 = vld [vmem:[#allocation8 + $0x8] sm:$0xf]
    %v795 = vld [vmem:[#allocation8 + $0xc] sm:$0xf]
    %v796 = vld [vmem:[#allocation8 + $0x10] sm:$0xf]
    %v797 = vld [vmem:[#allocation8 + $0x14] sm:$0xf]
    %v798 = vld [vmem:[#allocation8 + $0x18] sm:$0xf]
    %v799 = vld [vmem:[#allocation8 + $0x1c] sm:$0xf]
    %v800 = vld [vmem:[#allocation8 + $0x20] sm:$0xf]
    %v801 = vld [vmem:[#allocation8 + $0x24] sm:$0xf]
    %v802 = vld [vmem:[#allocation8 + $0x28] sm:$0xf]
    %v803 = vld [vmem:[#allocation8 + $0x2c] sm:$0xf]
    %v804 = vld [vmem:[#allocation8 + $0x30] sm:$0xf]
    %v805 = vld [vmem:[#allocation8 + $0x34] sm:$0xf]
    %v806 = vld [vmem:[#allocation8 + $0x38] sm:$0xf]
    %v807 = vld [vmem:[#allocation8 + $0x3c] sm:$0xf]
    %v808 = vld [vmem:[%s5] sm:$0x1]
    %v810 = vperm.slane %v808, 0
    %v814 = vunpack.c.l.b16 %v790
    %v815 = vunpack.c.l.b16 %v791
    %v816 = vpack.c.b16 %v815, %v814
    %v834 = vunpack.c.l.b16 %v792
    %v835 = vunpack.c.l.b16 %v793
    %v836 = vunpack.c.l.b16 %v794
    %v837 = vunpack.c.l.b16 %v795
    %v838 = vunpack.c.l.b16 %v796
    %v839 = vunpack.c.l.b16 %v797
    %v840 = vunpack.c.l.b16 %v798
    %v841 = vunpack.c.l.b16 %v799
    %v842 = vunpack.c.l.b16 %v800
    %v843 = vunpack.c.l.b16 %v801
    %v844 = vunpack.c.l.b16 %v802
    %v845 = vunpack.c.l.b16 %v803
    %v846 = vunpack.c.l.b16 %v804
    %v847 = vunpack.c.l.b16 %v805
    %v848 = vunpack.c.l.b16 %v806
    %v849 = vunpack.c.l.b16 %v807
    %v850 = vpack.c.b16 %v835, %v834
    %v851 = vpack.c.b16 %v837, %v836
    %v852 = vpack.c.b16 %v839, %v838
    %v853 = vpack.c.b16 %v841, %v840
    %v854 = vpack.c.b16 %v843, %v842
    %v855 = vpack.c.b16 %v845, %v844
    %v856 = vpack.c.b16 %v847, %v846
    %v857 = vpack.c.b16 %v849, %v848
    %866 = vmatpush.bf16.msra.mxu0 %v857
    %867 = vmatpush.bf16.msra.mxu0 %v856
    %868 = vmatpush.bf16.msra.mxu0 %v855
    %869 = vmatpush.bf16.msra.mxu0 %v854
    %870 = vmatpush.bf16.msra.mxu0 %v853
    %871 = vmatpush.bf16.msra.mxu0 %v852
    %872 = vmatpush.bf16.msra.mxu0 %v851
    %873 = vmatpush.bf16.msra.mxu0 %v850
    %874 = vmatmul.bf16.gmra.mxu0 %v816
    %v875 = vpop.f32.mrf.mxu0
    %v876 = vadd.f32 %v810, %v875
    %v877 = vpop.f32.mrf.mxu0
    %v878 = vadd.f32 %v810, %v877
    %879 = vdwg.mxu0
    %880 = vst [vmem:[#allocation11] sm:$0xff] %v876
    %881 = vst [vmem:[#allocation11 + $0x8] sm:$0xff] %v878
    %882 = vst [vmem:[#allocation12] sm:$0xf] %v790
    %883 = vst [vmem:[#allocation12 + $0x4] sm:$0xf] %v791
    %v884 = vld [vmem:[#allocation5] sm:$0xf]
    %v885 = vld [vmem:[#allocation5 + $0x4] sm:$0xf]
    %v886 = vld [vmem:[#allocation10] sm:$0xf]
    %v887 = vld [vmem:[#allocation10 + $0x4] sm:$0xf]
    %v888 = vld [vmem:[#allocation10 + $0x8] sm:$0xf]
    %v889 = vld [vmem:[#allocation10 + $0xc] sm:$0xf]
    %v890 = vld [vmem:[#allocation10 + $0x10] sm:$0xf]
    %v891 = vld [vmem:[#allocation10 + $0x14] sm:$0xf]
    %v892 = vld [vmem:[#allocation10 + $0x18] sm:$0xf]
    %v893 = vld [vmem:[#allocation10 + $0x1c] sm:$0xf]
    %v894 = vld [vmem:[#allocation10 + $0x20] sm:$0xf]
    %v895 = vld [vmem:[#allocation10 + $0x24] sm:$0xf]
    %v896 = vld [vmem:[#allocation10 + $0x28] sm:$0xf]
    %v897 = vld [vmem:[#allocation10 + $0x2c] sm:$0xf]
    %v898 = vld [vmem:[#allocation10 + $0x30] sm:$0xf]
    %v899 = vld [vmem:[#allocation10 + $0x34] sm:$0xf]
    %v900 = vld [vmem:[#allocation10 + $0x38] sm:$0xf]
    %v901 = vld [vmem:[#allocation10 + $0x3c] sm:$0xf]
    %v902 = vld [vmem:[%s7] sm:$0x1]
    %v904 = vperm.slane %v902, 0
    %v908 = vunpack.c.l.b16 %v884
    %v909 = vunpack.c.l.b16 %v885
    %v910 = vpack.c.b16 %v909, %v908
    %v928 = vunpack.c.l.b16 %v886
    %v929 = vunpack.c.l.b16 %v887
    %v930 = vunpack.c.l.b16 %v888
    %v931 = vunpack.c.l.b16 %v889
    %v932 = vunpack.c.l.b16 %v890
    %v933 = vunpack.c.l.b16 %v891
    %v934 = vunpack.c.l.b16 %v892
    %v935 = vunpack.c.l.b16 %v893
    %v936 = vunpack.c.l.b16 %v894
    %v937 = vunpack.c.l.b16 %v895
    %v938 = vunpack.c.l.b16 %v896
    %v939 = vunpack.c.l.b16 %v897
    %v940 = vunpack.c.l.b16 %v898
    %v941 = vunpack.c.l.b16 %v899
    %v942 = vunpack.c.l.b16 %v900
    %v943 = vunpack.c.l.b16 %v901
    %v944 = vpack.c.b16 %v929, %v928
    %v945 = vpack.c.b16 %v931, %v930
    %v946 = vpack.c.b16 %v933, %v932
    %v947 = vpack.c.b16 %v935, %v934
    %v948 = vpack.c.b16 %v937, %v936
    %v949 = vpack.c.b16 %v939, %v938
    %v950 = vpack.c.b16 %v941, %v940
    %v951 = vpack.c.b16 %v943, %v942
    %960 = vmatpush.bf16.msra.mxu0 %v951
    %961 = vmatpush.bf16.msra.mxu0 %v950
    %962 = vmatpush.bf16.msra.mxu0 %v949
    %963 = vmatpush.bf16.msra.mxu0 %v948
    %964 = vmatpush.bf16.msra.mxu0 %v947
    %965 = vmatpush.bf16.msra.mxu0 %v946
    %966 = vmatpush.bf16.msra.mxu0 %v945
    %967 = vmatpush.bf16.msra.mxu0 %v944
    %968 = vmatmul.bf16.gmra.mxu0 %v910
    %v969 = vpop.f32.mrf.mxu0
    %v970 = vadd.f32 %v904, %v969
    %v971 = vpop.f32.mrf.mxu0
    %v972 = vadd.f32 %v904, %v971
    %973 = vdwg.mxu0
    %974 = vst [vmem:[#allocation14] sm:$0xff] %v970
    %975 = vst [vmem:[#allocation14 + $0x8] sm:$0xff] %v972
    // Predicated region
    $region54: #{tpu_custom_call.1} parent=1 // pred_check
      _
    $region55: #{tpu_custom_call.1} parent=1 // pred_check_branch
      %977 = sbr.rel (0) target = $region57
    $region56: #{tpu_custom_call.1} parent=1 // pred_region
      %979 = vsyncadd [#allocation4], 0
      %s980 = sshll.u32 [#allocation11], 4
      %s981 = int_to_ptr.vmem [resolvable:$true] %s980
      %s982 = sshll.u32 %s8, 4
      %s983 = int_to_ptr.hbm [resolvable:$true] %s982
      %988 = dma.vmem_to_hbm [thread:$0]  %s981, 256, %s983, [#allocation4], 128, 128, 8
    $region57: #{tpu_custom_call.1} parent=1 // pred_fallthru
      _
    // Predicated region
    $region58: #{tpu_custom_call.1} parent=1 // pred_check
      _
    $region59: #{tpu_custom_call.1} parent=1 // pred_check_branch
      %990 = sbr.rel (0) target = $region61
    $region60: #{tpu_custom_call.1} parent=1 // pred_region
      %992 = vsyncadd [#allocation13], 0
      %s993 = sshll.u32 [#allocation12], 4
      %s994 = int_to_ptr.vmem [resolvable:$true] %s993
      %s995 = sshll.u32 %s9, 4
      %s996 = int_to_ptr.hbm [resolvable:$true] %s995
      %1001 = dma.vmem_to_hbm [thread:$0]  %s994, 128, %s996, [#allocation13], 64, 64, 4
    $region61: #{tpu_custom_call.1} parent=1 // pred_fallthru
      _
    // Predicated region
    $region62: #{tpu_custom_call.1} parent=1 // pred_check
      _
    $region63: #{tpu_custom_call.1} parent=1 // pred_check_branch
      %1003 = sbr.rel (0) target = $region65
    $region64: #{tpu_custom_call.1} parent=1 // pred_region
      %1005 = vsyncadd [#allocation13], 0
      %s1006 = sshll.u32 [#allocation14], 4
      %s1007 = int_to_ptr.vmem [resolvable:$true] %s1006
      %s1008 = sshll.u32 %s10, 4
      %s1009 = int_to_ptr.hbm [resolvable:$true] %s1008
      %1014 = dma.vmem_to_hbm [thread:$0]  %s1007, 256, %s1009, [#allocation13], 128, 128, 8
    $region65: #{tpu_custom_call.1} parent=1 // pred_fallthru
      _
    // Predicated region
    $region66: #{tpu_custom_call.1} parent=1 // pred_check
      _
    $region67: #{tpu_custom_call.1} parent=1 // pred_check_branch
      %1016 = sbr.rel (0) target = $region69
    $region68: #{tpu_custom_call.1} parent=1 // pred_region
      %1018 = dma.done [#allocation4], 256
    $region69: #{tpu_custom_call.1} parent=1 // pred_fallthru
      _
    // Predicated region
    $region70: #{tpu_custom_call.1} parent=1 // pred_check
      _
    $region71: #{tpu_custom_call.1} parent=1 // pred_check_branch
      %1020 = sbr.rel (0) target = $region73
    $region72: #{tpu_custom_call.1} parent=1 // pred_region
      %1022 = dma.done [#allocation13], 128
    $region73: #{tpu_custom_call.1} parent=1 // pred_fallthru
      _
    // Predicated region
    $region74: #{tpu_custom_call.1} parent=1 // pred_check
      _
    $region75: #{tpu_custom_call.1} parent=1 // pred_check_branch
      %1024 = sbr.rel (0) target = $region77
    $region76: #{tpu_custom_call.1} parent=1 // pred_region
      %1026 = dma.done [#allocation13], 256
    $region77: #{tpu_custom_call.1} parent=1 // pred_fallthru
      _
    %1027 = vsyncpa [#allocation3], 1
    %1028 = vsyncpa [#allocation6], 1
    %1029 = vsyncpa [#allocation9], 1
    %1030 = vsyncpa [#allocation4], 1
    %1031 = vsyncpa [#allocation13], 1

</llo_original>
